<compile_context>
chip_gen: v6e
topology: v6e:2x2x1
jax: 0.10.0
libtpu: 0.0.40
codegen_flags: <defaults>
</compile_context>

<pallas_src>
import math
from typing import NamedTuple

import jax
import jax.numpy as jnp
from jax import lax
from jax.experimental import pallas as pl
from jax.experimental.pallas import tpu as pltpu


_LANE = 128
_SUBLANE = 8


def _round_up(n, m):
    return ((n + m - 1) // m) * m


def _vmem_budget_bytes():
    """~75% of physical VMEM (generation-aware); conservative fallback."""
    try:
        cap = int(pltpu.get_tpu_info().vmem_capacity_bytes)
    except Exception:
        cap = 64 * 1024 * 1024  # assume smallest (v7x-like) VMEM if unknown
    return max(16 * 1024 * 1024, int(cap * 0.75))


# ---------------------------------------------------------------------------
# Pallas kernel: logits tile = (x / max(||x||, eps)) @ w_scaled.T
# w_scaled already carries t / max(||w||, eps) and is bf16.
# ---------------------------------------------------------------------------
def _cos_logits_kernel(x_ref, w_ref, o_ref):
    xf = x_ref[...].astype(jnp.float32)                       # (TB, Dp)
    x_sq = jnp.sum(xf * xf, axis=-1, keepdims=True)           # (TB, 1)
    x_inv = lax.rsqrt(jnp.maximum(x_sq, 1e-16))                # 1/max(||x||,1e-8), EUP
    xn = (xf * x_inv).astype(w_ref.dtype)                      # normalize pre-MXU (bf16)
    o_ref[...] = lax.dot_general(
        xn, w_ref[...],
        dimension_numbers=(((1,), (1,)), ((), ())),
        preferred_element_type=jnp.float32,
    ).astype(o_ref.dtype)                                      # straight off the MXU


class PreparedCosWeight(NamedTuple):
    w: jax.Array       # (C_pad, D_pad) matmul dtype, rows scaled by t/max(||w||,eps)
    num_class: int     # original C
    indim: int         # original D
    tile_c: int        # class tile (multiple of 128, divides C_pad)


def prepare_cos_weight(weight, t=10.0, *, eps=1e-8, matmul_dtype=jnp.bfloat16):
    """Fold t and 1/max(||w||,eps) into the weight, cast to bf16, pad C and D."""
    C, D = weight.shape
    D_pad = _round_up(max(D, _LANE), _LANE)

    wf = weight.astype(jnp.float32)
    w_norm = jnp.sqrt(jnp.sum(wf * wf, axis=1, keepdims=True))     # (C, 1)
    w_scaled = (jnp.float32(t) * wf / jnp.maximum(w_norm, eps)).astype(matmul_dtype)

    # Class tile: largest lane multiple whose tile fits ~1/3 of the VMEM budget.
    budget = _vmem_budget_bytes()
    w_item = jnp.dtype(matmul_dtype).itemsize
    tc_cap = max(_LANE, ((budget // 3) // (D_pad * w_item)) // _LANE * _LANE)
    tc = min(tc_cap, _round_up(C, _LANE))
    C_pad = _round_up(C, tc)

    w_scaled = jnp.pad(w_scaled, ((0, C_pad - C), (0, D_pad - D)))
    return PreparedCosWeight(w_scaled, C, D, tc)


def cos_logits(x, weight, t=10.0, *, tile_b=512, eps=1e-8):
    """t * cosine_similarity(x[:,None,:], w[None,:,:], dim=2), eps per-vector."""
    if not isinstance(weight, PreparedCosWeight):
        weight = prepare_cos_weight(weight, t, eps=eps)
    prep = weight

    B, D = x.shape
    assert D == prep.indim, "feature dim mismatch with prepared weight"
    C = prep.num_class
    C_pad, D_pad = prep.w.shape
    tc = prep.tile_c
    nc = C_pad // tc

    vmem_limit = _vmem_budget_bytes()

    # Batch tile from leftover VMEM (x + out tiles are double-buffered).
    w_bufs = 1 if nc == 1 else 2
    w_bytes = tc * D_pad * prep.w.dtype.itemsize * w_bufs
    per_row = D_pad * x.dtype.itemsize * 2 + tc * 4 * 2
    leftover = max(0, int((vmem_limit - w_bytes) * 0.7))
    tb_cap = max(_SUBLANE, (leftover // per_row) // _SUBLANE * _SUBLANE)
    tb = max(_SUBLANE, min(int(tile_b), tb_cap, _round_up(B, _SUBLANE)))
    tb = (tb // _SUBLANE) * _SUBLANE

    B_pad = _round_up(B, tb)
    xp = x
    if (B_pad, D_pad) != (B, D):
        xp = jnp.pad(x, ((0, B_pad - B), (0, D_pad - D)))   # zero cols keep norms/dots

    def make_call(weight_pipeline_mode):
        w_kwargs = {}
        if weight_pipeline_mode is not None:
            w_kwargs["pipeline_mode"] = weight_pipeline_mode
        return pl.pallas_call(
            _cos_logits_kernel,
            out_shape=jax.ShapeDtypeStruct((B_pad, C_pad), jnp.float32),
            grid_spec=pltpu.PrefetchScalarGridSpec(
                num_scalar_prefetch=0,
                grid=(B_pad // tb, C_pad // tc),
                in_specs=[
                    pl.BlockSpec((tb, D_pad), lambda i, j: (i, 0)),      # x batch tile
                    pl.BlockSpec((tc, D_pad), lambda i, j: (j, 0), **w_kwargs),
                ],
                out_specs=pl.BlockSpec((tb, tc), lambda i, j: (i, j)),
            ),
            compiler_params=pltpu.CompilerParams(
                dimension_semantics=("parallel", "parallel"),
                vmem_limit_bytes=vmem_limit,
            ),
        )

    if nc == 1:
        # Grid-invariant weight block -> nothing to double-buffer: pin to one
        # buffer (halves the dominant VMEM consumer on v7x).  Fall back to the
        # default pipelining if single-buffering is rejected.
        try:
            out = make_call(pl.Buffered(1))(xp, prep.w)
        except Exception:
            out = make_call(None)(xp, prep.w)
    else:
        out = make_call(None)(xp, prep.w)

    return out[:B, :C]


# ---------------------------------------------------------------------------
# Glue: cross-entropy (ignore_index=-1), accuracy, per-class counts.
# TODO(synk): for very large class counts (esp. v5e) the log-softmax/NLL and
# argmax could be fused into a class-tiled online-softmax Pallas pass to avoid
# the (B, C) f32 logits HBM round trip; kept as plain JAX here.
# ---------------------------------------------------------------------------
def cross_entropy_ignore(pred, labels, ignore_index=-1):
    valid = labels != ignore_index
    safe = jnp.where(valid, labels, 0)
    logp = jax.nn.log_softmax(pred, axis=-1)
    nll = -jnp.take_along_axis(logp, safe[:, None], axis=1)[:, 0]
    n_valid = jnp.sum(valid.astype(jnp.float32))
    # Matches torch CrossEntropyLoss(reduction='mean'): mean over valid rows,
    # NaN (0/0) when every label is ignore_index.
    return jnp.sum(jnp.where(valid, nll, 0.0)) / n_valid


def accuracy(pred, labels, num_class):
    preds = jnp.argmax(pred, axis=1)
    valid = (labels >= 0).astype(jnp.int32)
    acc_sum = jnp.sum(valid * (preds == labels).astype(jnp.int32))
    instance_sum = jnp.sum(valid)
    acc = acc_sum.astype(jnp.float32) / (instance_sum.astype(jnp.float32) + 1e-10)

    # Mirror torch negative indexing: label -1 lands in the last column.
    idx = jnp.where(labels < 0, labels + num_class, labels)
    category_accuracy = jnp.zeros((2, num_class), jnp.float32)
    category_accuracy = category_accuracy.at[1, idx].add(1.0)
    hits = (preds == labels).astype(jnp.float32)
    category_accuracy = category_accuracy.at[0, idx].add(hits)
    return acc, category_accuracy


class CosClassifier:
    """JAX/Pallas port of the PyTorch CosClassifier forward pass."""

    def __init__(self, num_base_class, feat_dim, crop_width, crop_height, key):
        self.num_class = num_base_class
        self.indim = feat_dim * crop_width * crop_height
        self.outdim = num_base_class
        self.t = 10.0
        stdv = 1.0 / math.sqrt(self.indim)
        self.weight = jax.random.uniform(
            key, (self.outdim, self.indim), jnp.float32, minval=-stdv, maxval=stdv)
        # Norm fold + t + bf16 cast + lane padding cached once.  Call
        # refresh_weight() after any update to self.weight.
        self._prepared = prepare_cos_weight(self.weight, self.t)

    def refresh_weight(self):
        self._prepared = prepare_cos_weight(self.weight, self.t)

    def forward(self, data):
        feature, labels = data
        feat_layers = len(feature)
        loss = 0.0
        pred = None
        for i in range(feat_layers - 1, feat_layers):   # only the last layer
            x = feature[i]
            pred = cos_logits(x, self._prepared, self.t)
            loss = loss + cross_entropy_ignore(pred, labels, ignore_index=-1)
        acc, category_accuracy = accuracy(pred, labels, self.num_class)
        return loss, acc, category_accuracy


# ---------------------------------------------------------------------------
if __name__ == "__main__":
    key = jax.random.PRNGKey(0)
    k_w, k_x, k_l = jax.random.split(key, 3)

    # Small synthetic config with non-lane-aligned indim to exercise D padding:
    # feat_dim=6, crop 4x4 -> indim=96; 10 base classes; batch=8.
    num_base_class, feat_dim, crop_w, crop_h = 10, 6, 4, 4
    batch = 8
    indim = feat_dim * crop_w * crop_h

    clf = CosClassifier(num_base_class, feat_dim, crop_w, crop_h, k_w)

    x = jax.random.normal(k_x, (batch, indim), jnp.float32)
    labels = jax.random.randint(k_l, (batch,), 0, num_base_class)
    labels = labels.at[0].set(-1)   # exercise ignore_index=-1

    loss, acc, cat_acc = clf.forward(([x], labels))
    jax.block_until_ready((loss, acc, cat_acc))

    # Sanity check vs. a pure-JAX f32 reference (bf16 MXU -> relaxed tolerance).
    xn = x / jnp.maximum(jnp.linalg.norm(x, axis=1, keepdims=True), 1e-8)
    wn = clf.weight / jnp.maximum(
        jnp.linalg.norm(clf.weight, axis=1, keepdims=True), 1e-8)
    ref_pred = 10.0 * (xn @ wn.T)
    got_pred = cos_logits(x, clf._prepared, 10.0)
    assert got_pred.shape == ref_pred.shape
    max_err = float(jnp.max(jnp.abs(got_pred - ref_pred)))
    assert jnp.allclose(got_pred, ref_pred, atol=5e-2, rtol=2e-2), max_err
    assert jnp.isfinite(loss) and jnp.isfinite(acc)
    assert cat_acc.shape == (2, num_base_class)

    print("KERNEL_OK")
</pallas_src>

<mosaic_0001>
module attributes {stable_mosaic.version = 11 : i64} {
  func.func @_cos_logits_kernel(%arg0: i32, %arg1: i32, %arg2: memref<8x128xf32, #tpu.memory_space<vmem>>, %arg3: memref<128x128xbf16, #tpu.memory_space<vmem>>, %arg4: memref<8x128xf32, #tpu.memory_space<vmem>>) attributes {dimension_semantics = [#tpu.dimension_semantics<parallel>, #tpu.dimension_semantics<parallel>], iteration_bounds = array<i64: 1, 1>, scalar_prefetch = 0 : i64, scratch_operands = 0 : i64, tpu.core_type = #tpu.core_type<tc>, window_params = [{transform_indices = @transform_0, window_bounds = array<i64: 8, 128>}, {pipeline_mode = #tpu.pipeline_mode<synchronous>, transform_indices = @transform_1, window_bounds = array<i64: 128, 128>}, {transform_indices = @transform_2, window_bounds = array<i64: 8, 128>}]} {
    %c0 = arith.constant 0 : index
    %c0_0 = arith.constant 0 : index
    %0 = vector.load %arg2[%c0, %c0_0] : memref<8x128xf32, #tpu.memory_space<vmem>>, vector<8x128xf32>
    %1 = arith.mulf %0, %0 : vector<8x128xf32>
    %cst = arith.constant dense<0.000000e+00> : vector<8xf32>
    %2 = vector.multi_reduction <add>, %1, %cst [1] : vector<8x128xf32> to vector<8xf32>
    %3 = vector.shape_cast %2 : vector<8xf32> to vector<8x1xf32>
    %cst_1 = arith.constant 1.000000e-16 : f32
    %4 = vector.broadcast %cst_1 : f32 to vector<8x1xf32>
    %5 = arith.maximumf %3, %4 : vector<8x1xf32>
    %6 = math.rsqrt %5 : vector<8x1xf32>
    %7 = vector.broadcast %6 : vector<8x1xf32> to vector<8x128xf32>
    %8 = arith.mulf %0, %7 : vector<8x128xf32>
    %9 = arith.truncf %8 : vector<8x128xf32> to vector<8x128xbf16>
    %c0_2 = arith.constant 0 : index
    %c0_3 = arith.constant 0 : index
    %10 = vector.load %arg3[%c0_2, %c0_3] : memref<128x128xbf16, #tpu.memory_space<vmem>>, vector<128x128xbf16>
    %cst_4 = arith.constant dense<0.000000e+00> : vector<8x128xf32>
    %11 = tpu.matmul %9, %10, %cst_4 {dimension_numbers = #tpu.dot_dimension_numbers<[1], [1], [0], [0], [0, 0, 1, 0], [], []>} : vector<8x128xbf16>, vector<128x128xbf16>, vector<8x128xf32> -> vector<8x128xf32>
    %c0_5 = arith.constant 0 : index
    %c0_6 = arith.constant 0 : index
    %12 = vector.load %arg4[%c0_5, %c0_6] : memref<8x128xf32, #tpu.memory_space<vmem>>, vector<8x128xf32>
    tpu.vector_store %arg4[%c0_5, %c0_6], %11 {strides = array<i32>} : memref<8x128xf32, #tpu.memory_space<vmem>>, vector<8x128xf32>,
    return
  }
  func.func @transform_0(%arg0: i32, %arg1: i32) -> (i32, i32) {
    %c0_i32 = arith.constant 0 : i32
    %c0_i32_0 = arith.constant 0 : i32
    return %arg0, %c0_i32 : i32, i32
  }
  func.func @transform_1(%arg0: i32, %arg1: i32) -> (i32, i32) {
    %c0_i32 = arith.constant 0 : i32
    %c0_i32_0 = arith.constant 0 : i32
    return %arg1, %c0_i32 : i32, i32
  }
  func.func @transform_2(%arg0: i32, %arg1: i32) -> (i32, i32) {
    %c0_i32 = arith.constant 0 : i32
    return %arg0, %arg1 : i32, i32
  }
}

module attributes {stable_mosaic.version = 11 : i64} {
  func.func @_cos_logits_kernel(%arg0: i32, %arg1: i32, %arg2: memref<8x128xf32, #tpu.memory_space<vmem>>, %arg3: memref<128x128xbf16, #tpu.memory_space<vmem>>, %arg4: memref<8x128xf32, #tpu.memory_space<vmem>>) attributes {dimension_semantics = [#tpu.dimension_semantics<parallel>, #tpu.dimension_semantics<parallel>], iteration_bounds = array<i64: 1, 1>, scalar_prefetch = 0 : i64, scratch_operands = 0 : i64, tpu.core_type = #tpu.core_type<tc>, window_params = [{transform_indices = @transform_0, window_bounds = array<i64: 8, 128>}, {transform_indices = @transform_1, window_bounds = array<i64: 128, 128>}, {transform_indices = @transform_2, window_bounds = array<i64: 8, 128>}]} {
    %c0 = arith.constant 0 : index
    %c0_0 = arith.constant 0 : index
    %0 = vector.load %arg2[%c0, %c0_0] : memref<8x128xf32, #tpu.memory_space<vmem>>, vector<8x128xf32>
    %1 = arith.mulf %0, %0 : vector<8x128xf32>
    %cst = arith.constant dense<0.000000e+00> : vector<8xf32>
    %2 = vector.multi_reduction <add>, %1, %cst [1] : vector<8x128xf32> to vector<8xf32>
    %3 = vector.shape_cast %2 : vector<8xf32> to vector<8x1xf32>
    %cst_1 = arith.constant 1.000000e-16 : f32
    %4 = vector.broadcast %cst_1 : f32 to vector<8x1xf32>
    %5 = arith.maximumf %3, %4 : vector<8x1xf32>
    %6 = math.rsqrt %5 : vector<8x1xf32>
    %7 = vector.broadcast %6 : vector<8x1xf32> to vector<8x128xf32>
    %8 = arith.mulf %0, %7 : vector<8x128xf32>
    %9 = arith.truncf %8 : vector<8x128xf32> to vector<8x128xbf16>
    %c0_2 = arith.constant 0 : index
    %c0_3 = arith.constant 0 : index
    %10 = vector.load %arg3[%c0_2, %c0_3] : memref<128x128xbf16, #tpu.memory_space<vmem>>, vector<128x128xbf16>
    %cst_4 = arith.constant dense<0.000000e+00> : vector<8x128xf32>
    %11 = tpu.matmul %9, %10, %cst_4 {dimension_numbers = #tpu.dot_dimension_numbers<[1], [1], [0], [0], [0, 0, 1, 0], [], []>} : vector<8x128xbf16>, vector<128x128xbf16>, vector<8x128xf32> -> vector<8x128xf32>
    %c0_5 = arith.constant 0 : index
    %c0_6 = arith.constant 0 : index
    %12 = vector.load %arg4[%c0_5, %c0_6] : memref<8x128xf32, #tpu.memory_space<vmem>>, vector<8x128xf32>
    tpu.vector_store %arg4[%c0_5, %c0_6], %11 {strides = array<i32>} : memref<8x128xf32, #tpu.memory_space<vmem>>, vector<8x128xf32>,
    return
  }
  func.func @transform_0(%arg0: i32, %arg1: i32) -> (i32, i32) {
    %c0_i32 = arith.constant 0 : i32
    %c0_i32_0 = arith.constant 0 : i32
    return %arg0, %c0_i32 : i32, i32
  }
  func.func @transform_1(%arg0: i32, %arg1: i32) -> (i32, i32) {
    %c0_i32 = arith.constant 0 : i32
    %c0_i32_0 = arith.constant 0 : i32
    return %arg1, %c0_i32 : i32, i32
  }
  func.func @transform_2(%arg0: i32, %arg1: i32) -> (i32, i32) {
    %c0_i32 = arith.constant 0 : i32
    return %arg0, %arg1 : i32, i32
  }
}

</mosaic_0001>

<llo_original>
// kernel: tpu_custom_call.1
$region0: #{tpu_custom_call.1}
  #allocation0 [shape = 'u32[]', space=smem, size = 0x4, offset = 0x4, fixed_abs, tag = 'smem constant byte address 0x4 - core index']
  #allocation1 [shape = 'u32[144,128]{1,0:T(1,128)}', space=vmem, size = 0x12000, scoped, tag = 'internal scratch']
  %s0 = inlined_call_operand.hbm [shape: f32[8,128], index: 0, kind: input, shape index: {}]
  %s1 = inlined_call_operand.hbm [shape: bf16[128,128], index: 1, kind: input, shape index: {}]
  %s2 = inlined_call_operand.hbm [shape: f32[8,128], index: 2, kind: output, shape index: {}]
  %s3 = sld [smem:[#allocation0]]
  $region26: #{tpu_custom_call.1} parent=0
    _
  %s5 = ssub.s32 1, %s3
  %s6 = scalar_select 0, %s5, %s3
  $region1: #{tpu_custom_call.1} parent=0
    #allocation2 [shape = 'u8[4096]{0}', space=vmem, size = 0x1000, scoped, tag = 'input window, operand 0, single buffered']
    #allocation3 [shape = 's32[1]{0}', space=sflag, size = 0x4, scoped, tag = 'scoped memory for tpu_custom_call.1']
    #allocation4 [shape = 's32[1]{0}', space=sflag, size = 0x4, scoped, tag = 'scoped memory for tpu_custom_call.1']
    #allocation5 [shape = 'u8[32768]{0}', space=vmem, size = 0x8000, scoped, tag = 'input window, operand 1, single buffered']
    #allocation6 [shape = 's32[1]{0}', space=sflag, size = 0x4, scoped, tag = 'scoped memory for tpu_custom_call.1']
    #allocation7 [shape = 'u8[4096]{0}', space=vmem, size = 0x1000, scoped, tag = 'output window, operand 0, single buffered']
    %7 = vsyncpa [#allocation3], 0
    %8 = vsyncpa [#allocation6], 0
    %9 = vsyncpa [#allocation4], 0
    // Predicated region
    $region2: #{tpu_custom_call.1} parent=1 // pred_check
      _
    $region3: #{tpu_custom_call.1} parent=1 // pred_check_branch
      %11 = sbr.rel (0) target = $region5
    $region4: #{tpu_custom_call.1} parent=1 // pred_region
      %s13 = ssub.s32 128, 128
      %14 = vsyncadd [#allocation3], %s13
      %s16 = sshll.u32 [#allocation2], 4
      %s17 = int_to_ptr.vmem [resolvable:$true] %s16
      %19 = dma.hbm_to_vmem [thread:$0]  %s0, 128, %s17, [#allocation3]
    $region5: #{tpu_custom_call.1} parent=1 // pred_fallthru
      _
    // Predicated region
    $region6: #{tpu_custom_call.1} parent=1 // pred_check
      _
    $region7: #{tpu_custom_call.1} parent=1 // pred_check_branch
      %21 = sbr.rel (0) target = $region9
    $region8: #{tpu_custom_call.1} parent=1 // pred_region
      %s23 = ssub.s32 1024, 1024
      %24 = vsyncadd [#allocation6], %s23
      %s25 = sshll.u32 [#allocation5], 4
      %s26 = int_to_ptr.vmem [resolvable:$true] %s25
      %31 = dma.hbm_to_vmem [thread:$0]  %s1, 1024, %s26, [#allocation6], 64, 64, 4
    $region9: #{tpu_custom_call.1} parent=1 // pred_fallthru
      _
    // Predicated region
    $region10: #{tpu_custom_call.1} parent=1 // pred_check
      _
    $region11: #{tpu_custom_call.1} parent=1 // pred_check_branch
      %33 = sbr.rel (0) target = $region13
    $region12: #{tpu_custom_call.1} parent=1 // pred_region
      %34 = dma.done [#allocation3], 128
    $region13: #{tpu_custom_call.1} parent=1 // pred_fallthru
      _
    // Predicated region
    $region14: #{tpu_custom_call.1} parent=1 // pred_check
      _
    $region15: #{tpu_custom_call.1} parent=1 // pred_check_branch
      %36 = sbr.rel (0) target = $region17
    $region16: #{tpu_custom_call.1} parent=1 // pred_region
      %37 = dma.done [#allocation6], 1024
    $region17: #{tpu_custom_call.1} parent=1 // pred_fallthru
      _
    %v39 = vld [vmem:[#allocation2] sm:$0xff]
    %v40 = vmul.f32 %v39, %v39
    %41 = vadd.xlane.f32.xlu0 %v40
    %v42 = vpop.xlane.xlu0 %41
    %v43 = vmax.f32 %v42, 1e-16
    %v44 = vrsqrt.pop %v43
    %v45 = vmul.f32 %v39, %v44
    %v46 = vpack.c.bf16 %v45, %v45
    %v47 = vld [vmem:[#allocation5] sm:$0xf]
    %v48 = vld [vmem:[#allocation5 + $0x4] sm:$0xf]
    %v49 = vld [vmem:[#allocation5 + $0x8] sm:$0xf]
    %v50 = vld [vmem:[#allocation5 + $0xc] sm:$0xf]
    %v51 = vld [vmem:[#allocation5 + $0x10] sm:$0xf]
    %v52 = vld [vmem:[#allocation5 + $0x14] sm:$0xf]
    %v53 = vld [vmem:[#allocation5 + $0x18] sm:$0xf]
    %v54 = vld [vmem:[#allocation5 + $0x1c] sm:$0xf]
    %v55 = vld [vmem:[#allocation5 + $0x20] sm:$0xf]
    %v56 = vld [vmem:[#allocation5 + $0x24] sm:$0xf]
    %v57 = vld [vmem:[#allocation5 + $0x28] sm:$0xf]
    %v58 = vld [vmem:[#allocation5 + $0x2c] sm:$0xf]
    %v59 = vld [vmem:[#allocation5 + $0x30] sm:$0xf]
    %v60 = vld [vmem:[#allocation5 + $0x34] sm:$0xf]
    %v61 = vld [vmem:[#allocation5 + $0x38] sm:$0xf]
    %v62 = vld [vmem:[#allocation5 + $0x3c] sm:$0xf]
    %v79 = vunpack.c.l.b16 %v47
    %v80 = vunpack.c.l.b16 %v48
    %v81 = vunpack.c.l.b16 %v49
    %v82 = vunpack.c.l.b16 %v50
    %v83 = vunpack.c.l.b16 %v51
    %v84 = vunpack.c.l.b16 %v52
    %v85 = vunpack.c.l.b16 %v53
    %v86 = vunpack.c.l.b16 %v54
    %v87 = vunpack.c.l.b16 %v55
    %v88 = vunpack.c.l.b16 %v56
    %v89 = vunpack.c.l.b16 %v57
    %v90 = vunpack.c.l.b16 %v58
    %v91 = vunpack.c.l.b16 %v59
    %v92 = vunpack.c.l.b16 %v60
    %v93 = vunpack.c.l.b16 %v61
    %v94 = vunpack.c.l.b16 %v62
    %v95 = vpack.c.b16 %v80, %v79
    %v96 = vpack.c.b16 %v82, %v81
    %v97 = vpack.c.b16 %v84, %v83
    %v98 = vpack.c.b16 %v86, %v85
    %v99 = vpack.c.b16 %v88, %v87
    %v100 = vpack.c.b16 %v90, %v89
    %v101 = vpack.c.b16 %v92, %v91
    %v102 = vpack.c.b16 %v94, %v93
    %111 = vmatprep.subr.bf16.mxu0 0
    %112 = vmatpush1.bf16.xpose.msra.mxu0 %v102
    %113 = vmatprep.subr.bf16.mxu0 0
    %114 = vmatpush1.bf16.xpose.msra.mxu0 %v101
    %115 = vmatprep.subr.bf16.mxu0 0
    %116 = vmatpush1.bf16.xpose.msra.mxu0 %v100
    %117 = vmatprep.subr.bf16.mxu0 0
    %118 = vmatpush1.bf16.xpose.msra.mxu0 %v99
    %119 = vmatprep.subr.bf16.mxu0 0
    %120 = vmatpush1.bf16.xpose.msra.mxu0 %v98
    %121 = vmatprep.subr.bf16.mxu0 0
    %122 = vmatpush1.bf16.xpose.msra.mxu0 %v97
    %123 = vmatprep.subr.bf16.mxu0 0
    %124 = vmatpush1.bf16.xpose.msra.mxu0 %v96
    %125 = vmatprep.subr.bf16.mxu0 0
    %126 = vmatpush1.bf16.xpose.msra.mxu0 %v95
    %127 = vmatprep.subr.bf16.mxu0 0
    %128 = vmatpush2.bf16.xpose.msra.mxu0 0
    %129 = vmatprep.subr.bf16.mxu0 0
    %130 = vmatpush2.bf16.xpose.msra.mxu0 0
    %131 = vmatprep.subr.bf16.mxu0 0
    %132 = vmatpush2.bf16.xpose.msra.mxu0 0
    %133 = vmatprep.subr.bf16.mxu0 0
    %134 = vmatpush2.bf16.xpose.msra.mxu0 0
    %135 = vmatprep.subr.bf16.mxu0 0
    %136 = vmatpush2.bf16.xpose.msra.mxu0 0
    %137 = vmatprep.subr.bf16.mxu0 0
    %138 = vmatpush2.bf16.xpose.msra.mxu0 0
    %139 = vmatprep.subr.bf16.mxu0 0
    %140 = vmatpush2.bf16.xpose.msra.mxu0 0
    %141 = vmatprep.subr.bf16.mxu0 0
    %142 = vmatpush2.bf16.xpose.msra.mxu0 0
    %143 = vmatprep.mubr.bf16.mxu0 0
    %144 = vmatmul.mubr.bf16.gmra.mxu0 %v46
    %v145 = vpop.f32.mrf.mxu0
    %v146 = vadd.f32 0.0, %v145
    %v147 = vpop.f32.mrf.mxu0
    %v148 = vpop.f32.mrf.mxu0
    %v149 = vpop.f32.mrf.mxu0
    %150 = vdwg.mxu0
    %151 = vst [vmem:[#allocation7] sm:$0xff] %v146
    // Predicated region
    $region18: #{tpu_custom_call.1} parent=1 // pred_check
      _
    $region19: #{tpu_custom_call.1} parent=1 // pred_check_branch
      %153 = sbr.rel (0) target = $region21
    $region20: #{tpu_custom_call.1} parent=1 // pred_region
      %s155 = ssub.s32 128, 128
      %156 = vsyncadd [#allocation4], %s155
      %s158 = sshll.u32 [#allocation7], 4
      %s159 = int_to_ptr.vmem [resolvable:$true] %s158
      %161 = dma.vmem_to_hbm [thread:$0]  %s159, 128, %s2, [#allocation4]
    $region21: #{tpu_custom_call.1} parent=1 // pred_fallthru
      _
    // Predicated region
    $region22: #{tpu_custom_call.1} parent=1 // pred_check
      _
    $region23: #{tpu_custom_call.1} parent=1 // pred_check_branch
      %163 = sbr.rel (0) target = $region25
    $region24: #{tpu_custom_call.1} parent=1 // pred_region
      %164 = dma.done [#allocation4], 128
    $region25: #{tpu_custom_call.1} parent=1 // pred_fallthru
      _
    %165 = vsyncpa [#allocation3], 1
    %166 = vsyncpa [#allocation6], 1
    %167 = vsyncpa [#allocation4], 1

// kernel: tpu_custom_call.1
$region0: #{tpu_custom_call.1}
  #allocation0 [shape = 'u32[]', space=smem, size = 0x4, offset = 0x4, fixed_abs, tag = 'smem constant byte address 0x4 - core index']
  #allocation1 [shape = 'u32[144,128]{1,0:T(1,128)}', space=vmem, size = 0x12000, scoped, tag = 'internal scratch']
  %s0 = inlined_call_operand.hbm [shape: f32[8,128], index: 0, kind: input, shape index: {}]
  %s1 = inlined_call_operand.hbm [shape: bf16[128,128], index: 1, kind: input, shape index: {}]
  %s2 = inlined_call_operand.hbm [shape: f32[8,128], index: 2, kind: output, shape index: {}]
  %s3 = sld [smem:[#allocation0]]
  $region26: #{tpu_custom_call.1} parent=0
    _
  %s5 = ssub.s32 1, %s3
  %s6 = scalar_select 0, %s5, %s3
  $region1: #{tpu_custom_call.1} parent=0
    #allocation2 [shape = 'u8[4096]{0}', space=vmem, size = 0x1000, scoped, tag = 'input window, operand 0, single buffered']
    #allocation3 [shape = 's32[1]{0}', space=sflag, size = 0x4, scoped, tag = 'scoped memory for tpu_custom_call.1']
    #allocation4 [shape = 's32[1]{0}', space=sflag, size = 0x4, scoped, tag = 'scoped memory for tpu_custom_call.1']
    #allocation5 [shape = 'u8[32768]{0}', space=vmem, size = 0x8000, scoped, tag = 'input window, operand 1, single buffered']
    #allocation6 [shape = 's32[1]{0}', space=sflag, size = 0x4, scoped, tag = 'scoped memory for tpu_custom_call.1']
    #allocation7 [shape = 'u8[4096]{0}', space=vmem, size = 0x1000, scoped, tag = 'output window, operand 0, single buffered']
    %7 = vsyncpa [#allocation3], 0
    %8 = vsyncpa [#allocation6], 0
    %9 = vsyncpa [#allocation4], 0
    // Predicated region
    $region2: #{tpu_custom_call.1} parent=1 // pred_check
      _
    $region3: #{tpu_custom_call.1} parent=1 // pred_check_branch
      %11 = sbr.rel (0) target = $region5
    $region4: #{tpu_custom_call.1} parent=1 // pred_region
      %s13 = ssub.s32 128, 128
      %14 = vsyncadd [#allocation3], %s13
      %s16 = sshll.u32 [#allocation2], 4
      %s17 = int_to_ptr.vmem [resolvable:$true] %s16
      %19 = dma.hbm_to_vmem [thread:$0]  %s0, 128, %s17, [#allocation3]
    $region5: #{tpu_custom_call.1} parent=1 // pred_fallthru
      _
    // Predicated region
    $region6: #{tpu_custom_call.1} parent=1 // pred_check
      _
    $region7: #{tpu_custom_call.1} parent=1 // pred_check_branch
      %21 = sbr.rel (0) target = $region9
    $region8: #{tpu_custom_call.1} parent=1 // pred_region
      %s23 = ssub.s32 1024, 1024
      %24 = vsyncadd [#allocation6], %s23
      %s25 = sshll.u32 [#allocation5], 4
      %s26 = int_to_ptr.vmem [resolvable:$true] %s25
      %31 = dma.hbm_to_vmem [thread:$0]  %s1, 1024, %s26, [#allocation6], 64, 64, 4
    $region9: #{tpu_custom_call.1} parent=1 // pred_fallthru
      _
    // Predicated region
    $region10: #{tpu_custom_call.1} parent=1 // pred_check
      _
    $region11: #{tpu_custom_call.1} parent=1 // pred_check_branch
      %33 = sbr.rel (0) target = $region13
    $region12: #{tpu_custom_call.1} parent=1 // pred_region
      %34 = dma.done [#allocation3], 128
    $region13: #{tpu_custom_call.1} parent=1 // pred_fallthru
      _
    // Predicated region
    $region14: #{tpu_custom_call.1} parent=1 // pred_check
      _
    $region15: #{tpu_custom_call.1} parent=1 // pred_check_branch
      %36 = sbr.rel (0) target = $region17
    $region16: #{tpu_custom_call.1} parent=1 // pred_region
      %37 = dma.done [#allocation6], 1024
    $region17: #{tpu_custom_call.1} parent=1 // pred_fallthru
      _
    %v39 = vld [vmem:[#allocation2] sm:$0xff]
    %v40 = vmul.f32 %v39, %v39
    %41 = vadd.xlane.f32.xlu0 %v40
    %v42 = vpop.xlane.xlu0 %41
    %v43 = vmax.f32 %v42, 1e-16
    %v44 = vrsqrt.pop %v43
    %v45 = vmul.f32 %v39, %v44
    %v46 = vpack.c.bf16 %v45, %v45
    %v47 = vld [vmem:[#allocation5] sm:$0xf]
    %v48 = vld [vmem:[#allocation5 + $0x4] sm:$0xf]
    %v49 = vld [vmem:[#allocation5 + $0x8] sm:$0xf]
    %v50 = vld [vmem:[#allocation5 + $0xc] sm:$0xf]
    %v51 = vld [vmem:[#allocation5 + $0x10] sm:$0xf]
    %v52 = vld [vmem:[#allocation5 + $0x14] sm:$0xf]
    %v53 = vld [vmem:[#allocation5 + $0x18] sm:$0xf]
    %v54 = vld [vmem:[#allocation5 + $0x1c] sm:$0xf]
    %v55 = vld [vmem:[#allocation5 + $0x20] sm:$0xf]
    %v56 = vld [vmem:[#allocation5 + $0x24] sm:$0xf]
    %v57 = vld [vmem:[#allocation5 + $0x28] sm:$0xf]
    %v58 = vld [vmem:[#allocation5 + $0x2c] sm:$0xf]
    %v59 = vld [vmem:[#allocation5 + $0x30] sm:$0xf]
    %v60 = vld [vmem:[#allocation5 + $0x34] sm:$0xf]
    %v61 = vld [vmem:[#allocation5 + $0x38] sm:$0xf]
    %v62 = vld [vmem:[#allocation5 + $0x3c] sm:$0xf]
    %v79 = vunpack.c.l.b16 %v47
    %v80 = vunpack.c.l.b16 %v48
    %v81 = vunpack.c.l.b16 %v49
    %v82 = vunpack.c.l.b16 %v50
    %v83 = vunpack.c.l.b16 %v51
    %v84 = vunpack.c.l.b16 %v52
    %v85 = vunpack.c.l.b16 %v53
    %v86 = vunpack.c.l.b16 %v54
    %v87 = vunpack.c.l.b16 %v55
    %v88 = vunpack.c.l.b16 %v56
    %v89 = vunpack.c.l.b16 %v57
    %v90 = vunpack.c.l.b16 %v58
    %v91 = vunpack.c.l.b16 %v59
    %v92 = vunpack.c.l.b16 %v60
    %v93 = vunpack.c.l.b16 %v61
    %v94 = vunpack.c.l.b16 %v62
    %v95 = vpack.c.b16 %v80, %v79
    %v96 = vpack.c.b16 %v82, %v81
    %v97 = vpack.c.b16 %v84, %v83
    %v98 = vpack.c.b16 %v86, %v85
    %v99 = vpack.c.b16 %v88, %v87
    %v100 = vpack.c.b16 %v90, %v89
    %v101 = vpack.c.b16 %v92, %v91
    %v102 = vpack.c.b16 %v94, %v93
    %111 = vmatprep.subr.bf16.mxu0 0
    %112 = vmatpush1.bf16.xpose.msra.mxu0 %v102
    %113 = vmatprep.subr.bf16.mxu0 0
    %114 = vmatpush1.bf16.xpose.msra.mxu0 %v101
    %115 = vmatprep.subr.bf16.mxu0 0
    %116 = vmatpush1.bf16.xpose.msra.mxu0 %v100
    %117 = vmatprep.subr.bf16.mxu0 0
    %118 = vmatpush1.bf16.xpose.msra.mxu0 %v99
    %119 = vmatprep.subr.bf16.mxu0 0
    %120 = vmatpush1.bf16.xpose.msra.mxu0 %v98
    %121 = vmatprep.subr.bf16.mxu0 0
    %122 = vmatpush1.bf16.xpose.msra.mxu0 %v97
    %123 = vmatprep.subr.bf16.mxu0 0
    %124 = vmatpush1.bf16.xpose.msra.mxu0 %v96
    %125 = vmatprep.subr.bf16.mxu0 0
    %126 = vmatpush1.bf16.xpose.msra.mxu0 %v95
    %127 = vmatprep.subr.bf16.mxu0 0
    %128 = vmatpush2.bf16.xpose.msra.mxu0 0
    %129 = vmatprep.subr.bf16.mxu0 0
    %130 = vmatpush2.bf16.xpose.msra.mxu0 0
    %131 = vmatprep.subr.bf16.mxu0 0
    %132 = vmatpush2.bf16.xpose.msra.mxu0 0
    %133 = vmatprep.subr.bf16.mxu0 0
    %134 = vmatpush2.bf16.xpose.msra.mxu0 0
    %135 = vmatprep.subr.bf16.mxu0 0
    %136 = vmatpush2.bf16.xpose.msra.mxu0 0
    %137 = vmatprep.subr.bf16.mxu0 0
    %138 = vmatpush2.bf16.xpose.msra.mxu0 0
    %139 = vmatprep.subr.bf16.mxu0 0
    %140 = vmatpush2.bf16.xpose.msra.mxu0 0
    %141 = vmatprep.subr.bf16.mxu0 0
    %142 = vmatpush2.bf16.xpose.msra.mxu0 0
    %143 = vmatprep.mubr.bf16.mxu0 0
    %144 = vmatmul.mubr.bf16.gmra.mxu0 %v46
    %v145 = vpop.f32.mrf.mxu0
    %v146 = vadd.f32 0.0, %v145
    %v147 = vpop.f32.mrf.mxu0
    %v148 = vpop.f32.mrf.mxu0
    %v149 = vpop.f32.mrf.mxu0
    %150 = vdwg.mxu0
    %151 = vst [vmem:[#allocation7] sm:$0xff] %v146
    // Predicated region
    $region18: #{tpu_custom_call.1} parent=1 // pred_check
      _
    $region19: #{tpu_custom_call.1} parent=1 // pred_check_branch
      %153 = sbr.rel (0) target = $region21
    $region20: #{tpu_custom_call.1} parent=1 // pred_region
      %s155 = ssub.s32 128, 128
      %156 = vsyncadd [#allocation4], %s155
      %s158 = sshll.u32 [#allocation7], 4
      %s159 = int_to_ptr.vmem [resolvable:$true] %s158
      %161 = dma.vmem_to_hbm [thread:$0]  %s159, 128, %s2, [#allocation4]
    $region21: #{tpu_custom_call.1} parent=1 // pred_fallthru
      _
    // Predicated region
    $region22: #{tpu_custom_call.1} parent=1 // pred_check
      _
    $region23: #{tpu_custom_call.1} parent=1 // pred_check_branch
      %163 = sbr.rel (0) target = $region25
    $region24: #{tpu_custom_call.1} parent=1 // pred_region
      %164 = dma.done [#allocation4], 128
    $region25: #{tpu_custom_call.1} parent=1 // pred_fallthru
      _
    %165 = vsyncpa [#allocation3], 1
    %166 = vsyncpa [#allocation6], 1
    %167 = vsyncpa [#allocation4], 1

</llo_original>
